<compile_context>
chip_gen: v5e
topology: v5e:2x2
jax: 0.10.0
libtpu: 0.0.40
codegen_flags: <defaults>
</compile_context>

<pallas_src>
import jax
import jax.numpy as jnp
from jax.experimental import pallas as pl
from jax.experimental.pallas import tpu as pltpu


def _downblock_kernel(x_ref, sel_ref, o_ref):
    """One grid step of the pixel-unshuffle.

    x_ref  : (1, C, TH, PH*Wseg)   PH h-phases, each a contiguous Wseg-column segment
    sel_ref: (S, Wseg, TWo)        0/1 lane-selection matrices, one per sw phase
    o_ref  : (1, PH*S*C, TH, TWo)  output tile
    """
    S, Wseg, TWo = sel_ref.shape
    _, C, TH, lastd = x_ref.shape
    PH = lastd // Wseg                      # h-phases handled inside this step

    for ph in range(PH):
        # h-phase ph: contiguous column segment (no strided / dynamic ref indexing).
        xh = x_ref[0, :, :, ph * Wseg:(ph + 1) * Wseg]        # (C, TH, Wseg)
        x2 = xh.reshape(C * TH, Wseg)
        if x2.dtype != sel_ref.dtype:
            x2 = x2.astype(sel_ref.dtype)
        for sw in range(S):
            sel = sel_ref[sw]                                  # (Wseg, TWo)
            # w-phase: exact gather-by-matmul (one 1.0*x product per output element).
            r2 = jnp.dot(x2, sel, preferred_element_type=jnp.float32)   # (C*TH, TWo)
            co = (ph * S + sw) * C
            o_ref[0, co:co + C, :, :] = r2.reshape(C, TH, TWo).astype(o_ref.dtype)


def down_block(x, scale):
    """Pallas implementation of DownBlock.forward for NCHW input."""
    N, C, H, W = x.shape
    S = int(scale)
    assert H % S == 0 and W % S == 0
    Hs, Ws = H // S, W // S

    itemsize = jnp.dtype(x.dtype).itemsize
    compute_dtype = jnp.bfloat16 if x.dtype == jnp.bfloat16 else jnp.float32

    # Free row-major view: x_r[n, c, hs, s*W + w] == x[n, c, hs*S + s, w]
    x_r = x.reshape(N, C, Hs, S * W)

    lane_tiled = (Ws % 128 == 0)
    if lane_tiled:
        TWo, PH = 128, 1          # 128 output lanes per step, one h-phase per step
    else:
        TWo, PH = Ws, S           # full width, all h-phases inside one step
    Wseg = TWo * S                # contiguous input columns feeding one output tile
    nW = Ws // TWo
    lastd = PH * Wseg             # last-dim block size of the input

    # Row tile: biggest multiple of 8 dividing Hs under a ~2 MiB input-block budget.
    if Hs % 8 == 0:
        budget = 2 * 1024 * 1024
        max_th = max(8, budget // max(1, C * lastd * itemsize))
        TH = 8
        while TH * 2 <= min(max_th, 512) and Hs % (TH * 2) == 0:
            TH *= 2
    else:
        TH = Hs
    nH = Hs // TH

    # 0/1 selection matrices, one per sw phase: sel[sw, j, q] = (j == q*S + sw).
    rows = jnp.arange(Wseg, dtype=jnp.int32)[:, None]
    cols = jnp.arange(TWo, dtype=jnp.int32)[None, :] * S
    sel = jnp.stack(
        [(rows == cols + sw).astype(compute_dtype) for sw in range(S)], axis=0
    )                                                          # (S, Wseg, TWo)

    out_shape = jax.ShapeDtypeStruct((N, C * S * S, Hs, Ws), x.dtype)

    if lane_tiled:
        grid = (N, nH, nW, S)
        in_specs = [
            pl.BlockSpec((1, C, TH, Wseg),
                         lambda b, hi, wi, sh: (b, 0, hi, sh * nW + wi)),
            pl.BlockSpec((S, Wseg, TWo), lambda b, hi, wi, sh: (0, 0, 0)),
        ]
        out_spec = pl.BlockSpec((1, S * C, TH, TWo),
                                lambda b, hi, wi, sh: (b, sh, hi, wi))
        dims = ("parallel", "parallel", "arbitrary", "arbitrary")
    else:
        grid = (N, nH)
        in_specs = [
            pl.BlockSpec((1, C, TH, S * W), lambda b, hi: (b, 0, hi, 0)),
            pl.BlockSpec((S, Wseg, TWo), lambda b, hi: (0, 0, 0)),
        ]
        out_spec = pl.BlockSpec((1, C * S * S, TH, Ws), lambda b, hi: (b, 0, hi, 0))
        dims = ("parallel", "arbitrary")

    in_bytes = C * TH * lastd * itemsize
    out_bytes = in_bytes
    sel_bytes = S * Wseg * TWo * jnp.dtype(compute_dtype).itemsize
    vmem_limit = 2 * (in_bytes + out_bytes) + 2 * sel_bytes + (8 << 20)
    vmem_limit = int(min(max(vmem_limit, 32 << 20), 64 << 20))

    cost = pl.CostEstimate(
        flops=2 * N * C * H * W * Wseg,                # selection matmuls
        transcendentals=0,
        bytes_accessed=2 * N * C * H * W * itemsize,   # memory-bound reshuffle
    )

    return pl.pallas_call(
        _downblock_kernel,
        out_shape=out_shape,
        grid=grid,
        in_specs=in_specs,
        out_specs=out_spec,
        compiler_params=pltpu.CompilerParams(
            dimension_semantics=dims,
            vmem_limit_bytes=vmem_limit,
        ),
        cost_estimate=cost,
    )(x_r, sel)


if __name__ == "__main__":
    key = jax.random.PRNGKey(0)
    N, C, H, W, scale = 2, 4, 16, 16, 2

    x = jax.random.normal(key, (N, C, H, W), dtype=jnp.float32)

    out = down_block(x, scale)
    out = jax.block_until_ready(out)

    # Pure-JAX reference (identical to the PyTorch forward).
    ref = x.reshape(N, C, H // scale, scale, W // scale, scale)
    ref = jnp.transpose(ref, (0, 3, 5, 1, 2, 4))
    ref = ref.reshape(N, C * scale * scale, H // scale, W // scale)

    assert out.shape == ref.shape, (out.shape, ref.shape)
    assert jnp.allclose(out, ref, atol=1e-6), float(jnp.max(jnp.abs(out - ref)))

    print("KERNEL_OK")
</pallas_src>

<mosaic_0001>
module attributes {stable_mosaic.version = 11 : i64} {
  func.func @_downblock_kernel(%arg0: i32, %arg1: i32, %arg2: memref<1x4x8x32xf32, #tpu.memory_space<vmem>>, %arg3: memref<2x16x8xf32, #tpu.memory_space<vmem>>, %arg4: memref<1x16x8x8xf32, #tpu.memory_space<vmem>>) attributes {dimension_semantics = [#tpu.dimension_semantics<parallel>, #tpu.dimension_semantics<arbitrary>], iteration_bounds = array<i64: 2, 1>, scalar_prefetch = 0 : i64, scratch_operands = 0 : i64, tpu.core_type = #tpu.core_type<tc>, window_params = [{transform_indices = @transform_0, window_bounds = array<i64: 1, 4, 8, 32>}, {pipeline_mode = #tpu.pipeline_mode<synchronous>, transform_indices = @transform_1, window_bounds = array<i64: 2, 16, 8>}, {transform_indices = @transform_2, window_bounds = array<i64: 1, 16, 8, 8>}]} {
    %c0 = arith.constant 0 : index
    %c0_0 = arith.constant 0 : index
    %c0_1 = arith.constant 0 : index
    %c0_2 = arith.constant 0 : index
    %0 = vector.load %arg2[%c0, %c0_0, %c0_1, %c0_2] : memref<1x4x8x32xf32, #tpu.memory_space<vmem>>, vector<1x4x8x16xf32>
    %1 = vector.shape_cast %0 : vector<1x4x8x16xf32> to vector<4x8x16xf32>
    %2 = vector.shape_cast %1 : vector<4x8x16xf32> to vector<32x16xf32>
    %c0_3 = arith.constant 0 : index
    %c0_4 = arith.constant 0 : index
    %c0_5 = arith.constant 0 : index
    %3 = vector.load %arg3[%c0_3, %c0_4, %c0_5] : memref<2x16x8xf32, #tpu.memory_space<vmem>>, vector<1x16x8xf32>
    %4 = vector.shape_cast %3 : vector<1x16x8xf32> to vector<16x8xf32>
    %cst = arith.constant dense<0.000000e+00> : vector<32x8xf32>
    %5 = tpu.matmul %2, %4, %cst {dimension_numbers = #tpu.dot_dimension_numbers<[1], [0], [0], [1], [0, 0, 1, 1], [], []>} : vector<32x16xf32>, vector<16x8xf32>, vector<32x8xf32> -> vector<32x8xf32>
    %6 = vector.shape_cast %5 : vector<32x8xf32> to vector<4x8x8xf32>
    %c0_6 = arith.constant 0 : index
    %c0_7 = arith.constant 0 : index
    %c0_8 = arith.constant 0 : index
    %c0_9 = arith.constant 0 : index
    %7 = vector.load %arg4[%c0_6, %c0_7, %c0_8, %c0_9] : memref<1x16x8x8xf32, #tpu.memory_space<vmem>>, vector<1x4x8x8xf32>
    %8 = vector.shape_cast %7 : vector<1x4x8x8xf32> to vector<4x8x8xf32>
    %9 = vector.shape_cast %6 : vector<4x8x8xf32> to vector<1x4x8x8xf32>
    tpu.vector_store %arg4[%c0_6, %c0_7, %c0_8, %c0_9], %9 {strides = array<i32>} : memref<1x16x8x8xf32, #tpu.memory_space<vmem>>, vector<1x4x8x8xf32>,
    %c1 = arith.constant 1 : index
    %c0_10 = arith.constant 0 : index
    %c0_11 = arith.constant 0 : index
    %10 = vector.load %arg3[%c1, %c0_10, %c0_11] : memref<2x16x8xf32, #tpu.memory_space<vmem>>, vector<1x16x8xf32>
    %11 = vector.shape_cast %10 : vector<1x16x8xf32> to vector<16x8xf32>
    %cst_12 = arith.constant dense<0.000000e+00> : vector<32x8xf32>
    %12 = tpu.matmul %2, %11, %cst_12 {dimension_numbers = #tpu.dot_dimension_numbers<[1], [0], [0], [1], [0, 0, 1, 1], [], []>} : vector<32x16xf32>, vector<16x8xf32>, vector<32x8xf32> -> vector<32x8xf32>
    %13 = vector.shape_cast %12 : vector<32x8xf32> to vector<4x8x8xf32>
    %c0_13 = arith.constant 0 : index
    %c4 = arith.constant 4 : index
    %c0_14 = arith.constant 0 : index
    %c0_15 = arith.constant 0 : index
    %14 = vector.load %arg4[%c0_13, %c4, %c0_14, %c0_15] : memref<1x16x8x8xf32, #tpu.memory_space<vmem>>, vector<1x4x8x8xf32>
    %15 = vector.shape_cast %14 : vector<1x4x8x8xf32> to vector<4x8x8xf32>
    %16 = vector.shape_cast %13 : vector<4x8x8xf32> to vector<1x4x8x8xf32>
    tpu.vector_store %arg4[%c0_13, %c4, %c0_14, %c0_15], %16 {strides = array<i32>} : memref<1x16x8x8xf32, #tpu.memory_space<vmem>>, vector<1x4x8x8xf32>,
    %c0_16 = arith.constant 0 : index
    %c0_17 = arith.constant 0 : index
    %c0_18 = arith.constant 0 : index
    %c16 = arith.constant 16 : index
    %17 = vector.load %arg2[%c0_16, %c0_17, %c0_18, %c16] : memref<1x4x8x32xf32, #tpu.memory_space<vmem>>, vector<1x4x8x16xf32>
    %18 = vector.shape_cast %17 : vector<1x4x8x16xf32> to vector<4x8x16xf32>
    %19 = vector.shape_cast %18 : vector<4x8x16xf32> to vector<32x16xf32>
    %c0_19 = arith.constant 0 : index
    %c0_20 = arith.constant 0 : index
    %c0_21 = arith.constant 0 : index
    %20 = vector.load %arg3[%c0_19, %c0_20, %c0_21] : memref<2x16x8xf32, #tpu.memory_space<vmem>>, vector<1x16x8xf32>
    %21 = vector.shape_cast %20 : vector<1x16x8xf32> to vector<16x8xf32>
    %cst_22 = arith.constant dense<0.000000e+00> : vector<32x8xf32>
    %22 = tpu.matmul %19, %21, %cst_22 {dimension_numbers = #tpu.dot_dimension_numbers<[1], [0], [0], [1], [0, 0, 1, 1], [], []>} : vector<32x16xf32>, vector<16x8xf32>, vector<32x8xf32> -> vector<32x8xf32>
    %23 = vector.shape_cast %22 : vector<32x8xf32> to vector<4x8x8xf32>
    %c0_23 = arith.constant 0 : index
    %c8 = arith.constant 8 : index
    %c0_24 = arith.constant 0 : index
    %c0_25 = arith.constant 0 : index
    %24 = vector.load %arg4[%c0_23, %c8, %c0_24, %c0_25] : memref<1x16x8x8xf32, #tpu.memory_space<vmem>>, vector<1x4x8x8xf32>
    %25 = vector.shape_cast %24 : vector<1x4x8x8xf32> to vector<4x8x8xf32>
    %26 = vector.shape_cast %23 : vector<4x8x8xf32> to vector<1x4x8x8xf32>
    tpu.vector_store %arg4[%c0_23, %c8, %c0_24, %c0_25], %26 {strides = array<i32>} : memref<1x16x8x8xf32, #tpu.memory_space<vmem>>, vector<1x4x8x8xf32>,
    %c1_26 = arith.constant 1 : index
    %c0_27 = arith.constant 0 : index
    %c0_28 = arith.constant 0 : index
    %27 = vector.load %arg3[%c1_26, %c0_27, %c0_28] : memref<2x16x8xf32, #tpu.memory_space<vmem>>, vector<1x16x8xf32>
    %28 = vector.shape_cast %27 : vector<1x16x8xf32> to vector<16x8xf32>
    %cst_29 = arith.constant dense<0.000000e+00> : vector<32x8xf32>
    %29 = tpu.matmul %19, %28, %cst_29 {dimension_numbers = #tpu.dot_dimension_numbers<[1], [0], [0], [1], [0, 0, 1, 1], [], []>} : vector<32x16xf32>, vector<16x8xf32>, vector<32x8xf32> -> vector<32x8xf32>
    %30 = vector.shape_cast %29 : vector<32x8xf32> to vector<4x8x8xf32>
    %c0_30 = arith.constant 0 : index
    %c12 = arith.constant 12 : index
    %c0_31 = arith.constant 0 : index
    %c0_32 = arith.constant 0 : index
    %31 = vector.load %arg4[%c0_30, %c12, %c0_31, %c0_32] : memref<1x16x8x8xf32, #tpu.memory_space<vmem>>, vector<1x4x8x8xf32>
    %32 = vector.shape_cast %31 : vector<1x4x8x8xf32> to vector<4x8x8xf32>
    %33 = vector.shape_cast %30 : vector<4x8x8xf32> to vector<1x4x8x8xf32>
    tpu.vector_store %arg4[%c0_30, %c12, %c0_31, %c0_32], %33 {strides = array<i32>} : memref<1x16x8x8xf32, #tpu.memory_space<vmem>>, vector<1x4x8x8xf32>,
    return
  }
  func.func @transform_0(%arg0: i32, %arg1: i32) -> (i32, i32, i32, i32) {
    %c0_i32 = arith.constant 0 : i32
    %c0_i32_0 = arith.constant 0 : i32
    %c0_i32_1 = arith.constant 0 : i32
    return %arg0, %c0_i32, %arg1, %c0_i32_0 : i32, i32, i32, i32
  }
  func.func @transform_1(%arg0: i32, %arg1: i32) -> (i32, i32, i32) {
    %c0_i32 = arith.constant 0 : i32
    %c0_i32_0 = arith.constant 0 : i32
    %c0_i32_1 = arith.constant 0 : i32
    %c0_i32_2 = arith.constant 0 : i32
    return %c0_i32, %c0_i32_0, %c0_i32_1 : i32, i32, i32
  }
  func.func @transform_2(%arg0: i32, %arg1: i32) -> (i32, i32, i32, i32) {
    %c0_i32 = arith.constant 0 : i32
    %c0_i32_0 = arith.constant 0 : i32
    %c0_i32_1 = arith.constant 0 : i32
    return %arg0, %c0_i32, %arg1, %c0_i32_0 : i32, i32, i32, i32
  }
}

</mosaic_0001>

<llo_original>
// kernel: tpu_custom_call.1
$region0: #{tpu_custom_call.1}
  #allocation0 [shape = 'u32[]', space=smem, size = 0x4, offset = 0x4, fixed_abs, tag = 'smem constant byte address 0x4 - core index']
  #allocation1 [shape = 'u32[72,128]{1,0:T(1,128)}', space=vmem, size = 0x9000, scoped, tag = 'internal scratch']
  %s0 = inlined_call_operand.hbm [shape: f32[2,4,8,32], index: 0, kind: input, shape index: {}]
  %s1 = inlined_call_operand.vmem [shape: f32[2,16,8], index: 1, kind: input, shape index: {}]
  %s2 = inlined_call_operand.vmem [shape: f32[2,16,8,8], index: 2, kind: output, shape index: {}]
  %s3 = sld [smem:[#allocation0]]
  $region45: #{tpu_custom_call.1} parent=0
    _
  %s5 = ssub.s32 1, %s3
  %s6 = scalar_select 0, %s5, %s3
  $region1: #{tpu_custom_call.1} parent=0
    #allocation2 [shape = 'u8[32768]{0}', space=vmem, size = 0x8000, scoped, tag = 'input window, operand 0']
    #allocation3 [shape = 's32[2]{0}', space=sflag, size = 0x8, scoped, tag = 'scoped memory for tpu_custom_call.1']
    %7 = vsyncpa [#allocation3], 0
    %s8 = scalar_lea.sflag [#allocation3], 1
    %9 = vsyncpa %s8, 0
    loop: start=0, step=1, limit=4
    $region2: #{tpu_custom_call.1} parent=1 // loop_pre_header
      _
    $region3: #{tpu_custom_call.1} parent=1 // loop_header
      %s11 = sphi 0, %s15
      %p12 = scmp.ge.s32.totalorder %s11, 4
      %s18 = sphi 0, %s30
      %s19 = sphi 0, %s26
      %s20 = sphi 0, %s18
      %s21 = sphi 0, %s19
      %s22 = sphi 0, %s20
      %s23 = sphi 0, %s21
      %s35 = sphi 0, %s37
      %s38 = sphi 0, %s35
      %s39 = sphi 0, %s38
      %s55 = sphi 0, %s39
      %s59 = sphi 0, %s59
      %s61 = sphi 0, %s59
      %s62 = sphi 0, %s61
      %s76 = sphi 0, %s62
      %s84 = sphi 0, %s86
      %s87 = sphi 0, %s84
      %s88 = sphi 0, %s87
      %s104 = sphi 0, %s88
    $region4: #{tpu_custom_call.1} parent=1 // loop_header_branch
      %14 = sbr.rel (%p12) target = $region8
    $region5: #{tpu_custom_call.1} parent=1 // loop_body
      %s16 = ssub.s32 %s11, 1
      %s17 = ssub.s32 %s11, 2
      %s24 = sadd.s32 1, %s19
      %p25 = scmp.ge.s32.totalorder %s24, 1
      %s26 = scalar_select %p25, 0, %s24
      %s27 = sadd.s32 1, %s18
      %s28 = scalar_select %p25, %s27, %s18
      %p29 = scmp.ge.s32.totalorder %s28, 2
      %s30 = scalar_select %p29, 0, %s28
      %s31 = ssub.s32 %s18, %s30
      %s32 = ssub.s32 %s19, %s26
      %s33 = sor.u32 %s31, %s32
      %p34 = scmp.eq.s32.totalorder %s33, 0
      %s36 = sadd.s32 %s35, 1
      %s37 = scalar_select %p34, %s35, %s36
      %p40 = pneg %p34
      %p41 = scmp.eq.s32.totalorder %s11, 1
      %p42 = por %p40, %p41
      %p43 = scmp.ne.s32.totalorder %s35, %s38
      %p44 = scmp.eq.s32.totalorder %s11, 0
      %p45 = por %p43, %p44
      %p46 = scmp.ne.s32.totalorder %s35, %s38
      %p47 = scmp.eq.s32.totalorder %s16, 1
      %p48 = por %p46, %p47
      %p49 = scmp.ne.s32.totalorder %s38, %s39
      %p50 = scmp.eq.s32.totalorder %s16, 0
      %p51 = por %p49, %p50
      %p52 = scmp.ne.s32.totalorder %s38, %s39
      %p53 = scmp.eq.s32.totalorder %s17, 1
      %p54 = por %p52, %p53
      %p56 = scmp.ne.s32.totalorder %s39, %s55
      %p57 = scmp.eq.s32.totalorder %s17, 0
      %p58 = por %p56, %p57
      %s60 = sadd.s32 %s59, 1
      %p63 = scmp.eq.s32.totalorder %s11, 1
      %p64 = scmp.ne.s32.totalorder %s59, %s61
      %p65 = scmp.eq.s32.totalorder %s11, 0
      %p66 = por %p64, %p65
      %p67 = scmp.ne.s32.totalorder %s59, %s61
      %p68 = scmp.eq.s32.totalorder %s16, 1
      %p69 = por %p67, %p68
      %p70 = scmp.ne.s32.totalorder %s61, %s62
      %p71 = scmp.eq.s32.totalorder %s16, 0
      %p72 = por %p70, %p71
      %p73 = scmp.ne.s32.totalorder %s61, %s62
      %p74 = scmp.eq.s32.totalorder %s17, 1
      %p75 = por %p73, %p74
      %p77 = scmp.ne.s32.totalorder %s62, %s76
      %p78 = scmp.eq.s32.totalorder %s17, 0
      %p79 = por %p77, %p78
      %s80 = ssub.s32 %s18, %s30
      %s81 = ssub.s32 %s19, %s26
      %s82 = sor.u32 %s80, %s81
      %p83 = scmp.eq.s32.totalorder %s82, 0
      %s85 = sadd.s32 %s84, 1
      %s86 = scalar_select %p83, %s84, %s85
      %p89 = pneg %p83
      %p90 = scmp.eq.s32.totalorder %s11, 1
      %p91 = por %p89, %p90
      %p92 = scmp.ne.s32.totalorder %s84, %s87
      %p93 = scmp.eq.s32.totalorder %s11, 0
      %p94 = por %p92, %p93
      %p95 = scmp.ne.s32.totalorder %s84, %s87
      %p96 = scmp.eq.s32.totalorder %s16, 1
      %p97 = por %p95, %p96
      %p98 = scmp.ne.s32.totalorder %s87, %s88
      %p99 = scmp.eq.s32.totalorder %s16, 0
      %p100 = por %p98, %p99
      %p101 = scmp.ne.s32.totalorder %s87, %s88
      %p102 = scmp.eq.s32.totalorder %s17, 1
      %p103 = por %p101, %p102
      %p105 = scmp.ne.s32.totalorder %s88, %s104
      %p106 = scmp.eq.s32.totalorder %s17, 0
      %p107 = por %p105, %p106
      %p108 = scmp.le.s32.totalorder 1, %s11
      %p109 = scmp.lt.s32.totalorder %s11, 3
      %p110 = pnand %p108, %p109
      %p111 = pneg %p110
      // Predicated region
      $region9: #{tpu_custom_call.1} parent=5 // pred_check
        _
      $region10: #{tpu_custom_call.1} parent=5 // pred_check_branch
        %113 = sbr.rel (%p110) target = $region12
      $region11: #{tpu_custom_call.1} parent=5 // pred_region
        %s114 = ssub.s32 %s11, 1
        // Predicated region
        $region13: #{tpu_custom_call.1} parent=11 // pred_check
          %p115 = pneg %p72
        $region14: #{tpu_custom_call.1} parent=11 // pred_check_branch
          %117 = sbr.rel (%p115) target = $region16
        $region15: #{tpu_custom_call.1} parent=11 // pred_region
          _
        $region16: #{tpu_custom_call.1} parent=11 // pred_fallthru
          _
      $region12: #{tpu_custom_call.1} parent=5 // pred_fallthru
        _
      %p118 = scmp.lt.s32.totalorder %s11, 2
      // Predicated region
      $region17: #{tpu_custom_call.1} parent=5 // pred_check
        %p119 = pneg %p118
      $region18: #{tpu_custom_call.1} parent=5 // pred_check_branch
        %121 = sbr.rel (%p119) target = $region20
      $region19: #{tpu_custom_call.1} parent=5 // pred_region
        // Predicated region
        $region21: #{tpu_custom_call.1} parent=19 // pred_check
          %p122 = pneg %p45
        $region22: #{tpu_custom_call.1} parent=19 // pred_check_branch
          %124 = sbr.rel (%p122) target = $region24
        $region23: #{tpu_custom_call.1} parent=19 // pred_region
          %s125 = sand.u32 %s35, 1
          %s126 = scalar_lea.sflag [#allocation3], %s125
          %s127 = sand.u32 %s35, 1
          %s128 = smul.addr %s127, 32
          %s129 = scalar_lea.vmem [#allocation2], %s128
          %131 = vsyncadd %s126, 0
          %s132 = smul.addr %s18, 4
          %s133 = sadd.s32 %s19, %s132
          %s134 = smul.addr %s133, 8
          %s135 = scalar_lea.hbm %s0, %s134
          %s136 = sshll.u32 %s135, 4
          %s137 = int_to_ptr.hbm [resolvable:$true] %s136
          %s138 = sshll.u32 %s129, 4
          %s139 = int_to_ptr.vmem [resolvable:$true] %s138
          %144 = dma.hbm_to_vmem [thread:$0]  %s137, 512, %s139, %s126, 128, 128, 8
        $region24: #{tpu_custom_call.1} parent=19 // pred_fallthru
          _
      $region20: #{tpu_custom_call.1} parent=5 // pred_fallthru
        _
      %p145 = scmp.le.s32.totalorder 1, %s11
      %p146 = scmp.lt.s32.totalorder %s11, 3
      %p147 = pnand %p145, %p146
      %p148 = pneg %p147
      // Predicated region
      $region25: #{tpu_custom_call.1} parent=5 // pred_check
        _
      $region26: #{tpu_custom_call.1} parent=5 // pred_check_branch
        %150 = sbr.rel (%p147) target = $region28
      $region27: #{tpu_custom_call.1} parent=5 // pred_region
        %s151 = ssub.s32 %s11, 1
        %s152 = sand.u32 %s38, 1
        %s153 = scalar_lea.sflag [#allocation3], %s152
        %s154 = sand.u32 %s38, 1
        %s155 = smul.addr %s154, 32
        %s156 = scalar_lea.vmem [#allocation2], %s155
        // Predicated region
        $region29: #{tpu_custom_call.1} parent=27 // pred_check
          %p157 = pneg %p51
        $region30: #{tpu_custom_call.1} parent=27 // pred_check_branch
          %159 = sbr.rel (%p157) target = $region32
        $region31: #{tpu_custom_call.1} parent=27 // pred_region
          %161 = dma.done %s153, 512
        $region32: #{tpu_custom_call.1} parent=27 // pred_fallthru
          _
        %s162 = sand.u32 %s38, 1
        %s163 = scalar_lea.sflag [#allocation3], %s162
        %s164 = sand.u32 %s38, 1
        %s165 = smul.addr %s164, 32
        %s166 = scalar_lea.vmem [#allocation2], %s165
        %p167 = pneg %p51
        %p168 = pneg %p48
        %p169 = pneg %p72
        %p170 = pneg %p69
        %p171 = pneg %p100
        %p172 = pneg %p97
        %p173 = scmp.lt.s32.totalorder %s20, 1
        %s174 = scalar_select %p173, %s20, 1
        %p175 = scmp.lt.s32.totalorder %s21, 0
        %s176 = scalar_select %p175, %s21, 0
        %s177 = smul.addr %s174, 16
        %s178 = sadd.s32 %s176, %s177
        %s179 = smul.addr %s178, 8
        %s180 = scalar_lea.vmem %s2, %s179
        %p181 = scmp.lt.s32.totalorder %s20, 1
        %s182 = scalar_select %p181, %s20, 1
        %p183 = scmp.lt.s32.totalorder %s21, 0
        %s184 = scalar_select %p183, %s21, 0
        %s185 = smul.addr %s182, 16
        %s186 = sadd.s32 %s184, %s185
        %s187 = smul.addr %s186, 8
        %s188 = scalar_lea.vmem %s2, %s187
        %v189 = vld [vmem:[%s156] sm:$0xff]
        %v190 = vld [vmem:[%s156 + $0x8] sm:$0xff]
        %v191 = vld [vmem:[%s156 + $0x10] sm:$0xff]
        %v192 = vld [vmem:[%s156 + $0x18] sm:$0xff]
        %v193 = vld [vmem:[%s1] sm:$0xff]
        %v194 = vld [vmem:[%s1 + $0x8] sm:$0xff]
        %vm195 = vcmask 130048
        %v197 = vsel %vm195, %v189, 0
        %v200 = vsel %vm195, %v190, 0
        %v203 = vsel %vm195, %v191, 0
        %v206 = vsel %vm195, %v192, 0
        %208 = vmatpush.msra.mxu0 0.0
        %209 = vmatpush.msra.mxu0 0.0
        %210 = vmatpush.msra.mxu0 0.0
        %211 = vmatpush.msra.mxu0 0.0
        %212 = vmatpush.msra.mxu0 0.0
        %213 = vmatpush.msra.mxu0 0.0
        %214 = vmatpush.msra.mxu0 0.0
        %215 = vmatpush.msra.mxu0 0.0
        %216 = vmatpush.msra.mxu0 0.0
        %217 = vmatpush.msra.mxu0 0.0
        %218 = vmatpush.msra.mxu0 0.0
        %219 = vmatpush.msra.mxu0 0.0
        %220 = vmatpush.msra.mxu0 0.0
        %221 = vmatpush.msra.mxu0 0.0
        %222 = vmatpush.msra.mxu0 %v194
        %223 = vmatpush.msra.mxu0 %v193
        %224 = vmatmul.f32.gmra.mxu0 %v197
        %v225 = vpop.f32.mrf.mxu0
        %v226 = vadd.f32 0.0, %v225
        %227 = vmatmul.f32.gmra.mxu0 %v200
        %v228 = vpop.f32.mrf.mxu0
        %v229 = vadd.f32 0.0, %v228
        %230 = vmatmul.f32.gmra.mxu0 %v203
        %v231 = vpop.f32.mrf.mxu0
        %v232 = vadd.f32 0.0, %v231
        %233 = vmatmul.f32.gmra.mxu0 %v206
        %v234 = vpop.f32.mrf.mxu0
        %v235 = vadd.f32 0.0, %v234
        %236 = vdwg.mxu0
        %vm237 = vcmask 64512
        %238 = vst.msk [vmem:[%s188] sm:$0xff] %vm237, %v226
        %239 = vst.msk [vmem:[%s188 + $0x8] sm:$0xff] %vm237, %v229
        %240 = vst.msk [vmem:[%s188 + $0x10] sm:$0xff] %vm237, %v232
        %241 = vst.msk [vmem:[%s188 + $0x18] sm:$0xff] %vm237, %v235
        %s242 = scalar_lea.vmem %s1, 16
        %v243 = vld [vmem:[%s242] sm:$0xff]
        %v244 = vld [vmem:[%s242 + $0x8] sm:$0xff]
        %245 = vmatpush.msra.mxu0 0.0
        %246 = vmatpush.msra.mxu0 0.0
        %247 = vmatpush.msra.mxu0 0.0
        %248 = vmatpush.msra.mxu0 0.0
        %249 = vmatpush.msra.mxu0 0.0
        %250 = vmatpush.msra.mxu0 0.0
        %251 = vmatpush.msra.mxu0 0.0
        %252 = vmatpush.msra.mxu0 0.0
        %253 = vmatpush.msra.mxu0 0.0
        %254 = vmatpush.msra.mxu0 0.0
        %255 = vmatpush.msra.mxu0 0.0
        %256 = vmatpush.msra.mxu0 0.0
        %257 = vmatpush.msra.mxu0 0.0
        %258 = vmatpush.msra.mxu0 0.0
        %259 = vmatpush.msra.mxu0 %v244
        %260 = vmatpush.msra.mxu0 %v243
        %261 = vmatmul.f32.gmra.mxu0 %v197
        %v262 = vpop.f32.mrf.mxu0
        %v263 = vadd.f32 0.0, %v262
        %264 = vmatmul.f32.gmra.mxu0 %v200
        %v265 = vpop.f32.mrf.mxu0
        %v266 = vadd.f32 0.0, %v265
        %267 = vmatmul.f32.gmra.mxu0 %v203
        %v268 = vpop.f32.mrf.mxu0
        %v269 = vadd.f32 0.0, %v268
        %270 = vmatmul.f32.gmra.mxu0 %v206
        %v271 = vpop.f32.mrf.mxu0
        %v272 = vadd.f32 0.0, %v271
        %273 = vdwg.mxu0
        %s274 = scalar_lea.vmem %s188, 32
        %275 = vst.msk [vmem:[%s274] sm:$0xff] %vm237, %v263
        %276 = vst.msk [vmem:[%s274 + $0x8] sm:$0xff] %vm237, %v266
        %277 = vst.msk [vmem:[%s274 + $0x10] sm:$0xff] %vm237, %v269
        %278 = vst.msk [vmem:[%s274 + $0x18] sm:$0xff] %vm237, %v272
        %v279 = vld [vmem:[%s156] sm:$0xff]
        %v280 = vld [vmem:[%s156 + $0x8] sm:$0xff]
        %v281 = vld [vmem:[%s156 + $0x10] sm:$0xff]
        %v282 = vld [vmem:[%s156 + $0x18] sm:$0xff]
        %v283 = vld [vmem:[%s1] sm:$0xff]
        %v284 = vld [vmem:[%s1 + $0x8] sm:$0xff]
        %289 = vrot.lane.b32.xlu0 %v279, 112
        %v290 = vpop.permute.xlu0 %289
        %291 = vrot.lane.b32.xlu0 %v280, 112
        %v292 = vpop.permute.xlu0 %291
        %293 = vrot.lane.b32.xlu0 %v281, 112
        %v294 = vpop.permute.xlu0 %293
        %295 = vrot.lane.b32.xlu0 %v282, 112
        %v296 = vpop.permute.xlu0 %295
        %v297 = vsel %vm195, %v290, 0
        %v299 = vsel %vm195, %v292, 0
        %v301 = vsel %vm195, %v294, 0
        %v303 = vsel %vm195, %v296, 0
        %305 = vmatpush.msra.mxu0 0.0
        %306 = vmatpush.msra.mxu0 0.0
        %307 = vmatpush.msra.mxu0 0.0
        %308 = vmatpush.msra.mxu0 0.0
        %309 = vmatpush.msra.mxu0 0.0
        %310 = vmatpush.msra.mxu0 0.0
        %311 = vmatpush.msra.mxu0 0.0
        %312 = vmatpush.msra.mxu0 0.0
        %313 = vmatpush.msra.mxu0 0.0
        %314 = vmatpush.msra.mxu0 0.0
        %315 = vmatpush.msra.mxu0 0.0
        %316 = vmatpush.msra.mxu0 0.0
        %317 = vmatpush.msra.mxu0 0.0
        %318 = vmatpush.msra.mxu0 0.0
        %319 = vmatpush.msra.mxu0 %v284
        %320 = vmatpush.msra.mxu0 %v283
        %321 = vmatmul.f32.gmra.mxu0 %v297
        %v322 = vpop.f32.mrf.mxu0
        %v323 = vadd.f32 0.0, %v322
        %324 = vmatmul.f32.gmra.mxu0 %v299
        %v325 = vpop.f32.mrf.mxu0
        %v326 = vadd.f32 0.0, %v325
        %327 = vmatmul.f32.gmra.mxu0 %v301
        %v328 = vpop.f32.mrf.mxu0
        %v329 = vadd.f32 0.0, %v328
        %330 = vmatmul.f32.gmra.mxu0 %v303
        %v331 = vpop.f32.mrf.mxu0
        %v332 = vadd.f32 0.0, %v331
        %333 = vdwg.mxu0
        %s334 = scalar_lea.vmem %s188, 64
        %335 = vst.msk [vmem:[%s334] sm:$0xff] %vm237, %v323
        %336 = vst.msk [vmem:[%s334 + $0x8] sm:$0xff] %vm237, %v326
        %337 = vst.msk [vmem:[%s334 + $0x10] sm:$0xff] %vm237, %v329
        %338 = vst.msk [vmem:[%s334 + $0x18] sm:$0xff] %vm237, %v332
        %v339 = vld [vmem:[%s242] sm:$0xff]
        %v340 = vld [vmem:[%s242 + $0x8] sm:$0xff]
        %341 = vmatpush.msra.mxu0 0.0
        %342 = vmatpush.msra.mxu0 0.0
        %343 = vmatpush.msra.mxu0 0.0
        %344 = vmatpush.msra.mxu0 0.0
        %345 = vmatpush.msra.mxu0 0.0
        %346 = vmatpush.msra.mxu0 0.0
        %347 = vmatpush.msra.mxu0 0.0
        %348 = vmatpush.msra.mxu0 0.0
        %349 = vmatpush.msra.mxu0 0.0
        %350 = vmatpush.msra.mxu0 0.0
        %351 = vmatpush.msra.mxu0 0.0
        %352 = vmatpush.msra.mxu0 0.0
        %353 = vmatpush.msra.mxu0 0.0
        %354 = vmatpush.msra.mxu0 0.0
        %355 = vmatpush.msra.mxu0 %v340
        %356 = vmatpush.msra.mxu0 %v339
        %357 = vmatmul.f32.gmra.mxu0 %v297
        %v358 = vpop.f32.mrf.mxu0
        %v359 = vadd.f32 0.0, %v358
        %360 = vmatmul.f32.gmra.mxu0 %v299
        %v361 = vpop.f32.mrf.mxu0
        %v362 = vadd.f32 0.0, %v361
        %363 = vmatmul.f32.gmra.mxu0 %v301
        %v364 = vpop.f32.mrf.mxu0
        %v365 = vadd.f32 0.0, %v364
        %366 = vmatmul.f32.gmra.mxu0 %v303
        %v367 = vpop.f32.mrf.mxu0
        %v368 = vadd.f32 0.0, %v367
        %369 = vdwg.mxu0
        %s370 = scalar_lea.vmem %s188, 96
        %371 = vst.msk [vmem:[%s370] sm:$0xff] %vm237, %v359
        %372 = vst.msk [vmem:[%s370 + $0x8] sm:$0xff] %vm237, %v362
        %373 = vst.msk [vmem:[%s370 + $0x10] sm:$0xff] %vm237, %v365
        %374 = vst.msk [vmem:[%s370 + $0x18] sm:$0xff] %vm237, %v368
        %p375 = scmp.lt.s32.totalorder %s20, 1
        %s376 = scalar_select %p375, %s20, 1
        %p377 = scmp.lt.s32.totalorder %s21, 0
        %s378 = scalar_select %p377, %s21, 0
        %s379 = smul.addr %s376, 16
        %s380 = sadd.s32 %s378, %s379
        %s381 = smul.addr %s380, 8
        %s382 = scalar_lea.vmem %s2, %s381
        // Predicated region
        $region33: #{tpu_custom_call.1} parent=27 // pred_check
          %p383 = pneg %p97
        $region34: #{tpu_custom_call.1} parent=27 // pred_check_branch
          %385 = sbr.rel (%p383) target = $region36
        $region35: #{tpu_custom_call.1} parent=27 // pred_region
          _
        $region36: #{tpu_custom_call.1} parent=27 // pred_fallthru
          _
      $region28: #{tpu_custom_call.1} parent=5 // pred_fallthru
        _
      %p386 = scmp.le.s32.totalorder 2, %s11
      // Predicated region
      $region37: #{tpu_custom_call.1} parent=5 // pred_check
        %p387 = pneg %p386
      $region38: #{tpu_custom_call.1} parent=5 // pred_check_branch
        %389 = sbr.rel (%p387) target = $region40
      $region39: #{tpu_custom_call.1} parent=5 // pred_region
        %s390 = ssub.s32 %s11, 2
        // Predicated region
        $region41: #{tpu_custom_call.1} parent=39 // pred_check
          %p391 = pneg %p103
        $region42: #{tpu_custom_call.1} parent=39 // pred_check_branch
          %393 = sbr.rel (%p391) target = $region44
        $region43: #{tpu_custom_call.1} parent=39 // pred_region
          %p394 = scmp.lt.s32.totalorder %s22, 1
          %s395 = scalar_select %p394, %s22, 1
          %p396 = scmp.lt.s32.totalorder %s23, 0
          %s397 = scalar_select %p396, %s23, 0
          %s398 = smul.addr %s395, 16
          %s399 = sadd.s32 %s397, %s398
          %s400 = smul.addr %s399, 8
          %s401 = scalar_lea.vmem %s2, %s400
        $region44: #{tpu_custom_call.1} parent=39 // pred_fallthru
          _
      $region40: #{tpu_custom_call.1} parent=5 // pred_fallthru
        _
    $region6: #{tpu_custom_call.1} parent=1 // loop_footer
      %s15 = sadd.s32 1, %s11
    $region7: #{tpu_custom_call.1} parent=1 // loop_footer_branch
      %10 = sbr.rel target = $region3
    $region8: #{tpu_custom_call.1} parent=1 // loop_exit
      _
    %402 = vsyncpa [#allocation3], 1
    %s403 = scalar_lea.sflag [#allocation3], 1
    %404 = vsyncpa %s403, 1

</llo_original>
